<compile_context>
chip_gen: v5e
topology: v5e:2x2
jax: 0.10.0
libtpu: 0.0.40
codegen_flags: <defaults>
</compile_context>

<pallas_src>
import math

import jax
import jax.numpy as jnp
import numpy as np
from jax import lax
from jax.experimental import pallas as pl
from jax.experimental.pallas import tpu as pltpu

HIDDEN_DIM = 32          # hidden_dim of DreamRec_backbone
FREQ_DIM = 256           # DiT TimestepEmbedder frequency_embedding_size (default)
HALF_FREQ = FREQ_DIM // 2
BATCH = 8                # N for the small test
TM_MAX = 1024            # max rows per grid step (amortizes ~0.35 us/step overhead)
_NEG_LOG_MAX_PERIOD = -math.log(10000.0)


def _round_up(x, m):
    return ((x + m - 1) // m) * m


def _cdiv(a, b):
    return -(-a // b)


# ---------------------------------------------------------------------------
# Pallas kernel: freq embedding + step MLP + FinalLayer, fully fused.
# ---------------------------------------------------------------------------
def _dreamrec_kernel(step_ref, x_ref, c_ref,
                     w1c_ref, w1s_ref, b1_ref,
                     wfx_ref, wfy_ref, wt2_ref, bfp_ref,
                     out_ref):
    # Sinusoidal frequency table, built in-kernel (128 lanes, one exp on EUP).
    lane = lax.broadcasted_iota(jnp.int32, (1, HALF_FREQ), 1).astype(jnp.float32)
    freqs = jnp.exp(_NEG_LOG_MAX_PERIOD * lane / HALF_FREQ)            # (1, 128)

    args = step_ref[...] * freqs                                       # (TM, 128)

    # step_mlp first linear, with w1 pre-split so cat([cos, sin]) never materializes:
    #   h = cos(args) @ w1[:128] + sin(args) @ w1[128:] + b1
    h = (jnp.dot(jnp.cos(args), w1c_ref[...], preferred_element_type=jnp.float32)
         + jnp.dot(jnp.sin(args), w1s_ref[...], preferred_element_type=jnp.float32)
         + b1_ref[...])
    h = h * jax.nn.sigmoid(h)                                          # SiLU

    # FinalLayer with the second step-MLP linear folded into the t-weight:
    #   out = x @ wfx + cond @ wfy + h @ (w2 @ wft) + (bf + b2 @ wft)
    out = (jnp.dot(x_ref[...], wfx_ref[...], preferred_element_type=jnp.float32)
           + jnp.dot(c_ref[...], wfy_ref[...], preferred_element_type=jnp.float32)
           + jnp.dot(h, wt2_ref[...], preferred_element_type=jnp.float32)
           + bfp_ref[...])
    out_ref[...] = out.astype(out_ref.dtype)


# ---------------------------------------------------------------------------
# One-time weight repack (pure parameter algebra, no per-call cost).
# ---------------------------------------------------------------------------
def prepare_params(params):
    w1 = params["w1"]                      # (256, D)
    wft = params["wft"]                    # (D, D)   t-slice of FinalLayer weight
    return {
        "w1c": w1[:HALF_FREQ],             # multiplies cos(args)
        "w1s": w1[HALF_FREQ:],             # multiplies sin(args)
        "b1": params["b1"],
        "wfx": params["wfx"],
        "wfy": params["wfy"],
        "wt2": params["w2"] @ wft,         # fold:  h @ w2 @ wft
        "bfp": params["bf"] + params["b2"] @ wft,
    }


def _choose_tiling(n):
    """Pick (tile_rows, padded_rows): <=7+8*steps dead rows, >=2 grid steps when big."""
    n8 = _round_up(max(n, 1), 8)
    steps = _cdiv(n8, TM_MAX)
    if steps == 1 and n8 >= 512:           # let v7x's two TensorCores split the batch
        steps = 2
    tm = _round_up(_cdiv(n8, steps), 8)
    return tm, steps * tm


# ---------------------------------------------------------------------------
# Jitted wrapper (all glue + pallas_call under one jit -> no eager dispatch).
# ---------------------------------------------------------------------------
@jax.jit
def dreamrec_forward(x, condition, step, prepared):
    """x: (N, D), condition: (N, D), step: (N,) -> (N, D)"""
    n, d = x.shape
    tm, n_pad = _choose_tiling(n)

    step_col = step.astype(jnp.float32).reshape(n, 1)
    if n_pad != n:
        pad = ((0, n_pad - n), (0, 0))
        x = jnp.pad(x, pad)
        condition = jnp.pad(condition, pad)
        step_col = jnp.pad(step_col, pad)

    row = lambda width: pl.BlockSpec((tm, width), lambda i: (i, 0))
    resident = lambda arr: pl.BlockSpec(arr.shape, lambda i: (0, 0))

    out = pl.pallas_call(
        _dreamrec_kernel,
        out_shape=jax.ShapeDtypeStruct((n_pad, d), jnp.float32),
        grid=(n_pad // tm,),
        in_specs=[row(1),                  # step (N,1)
                  row(d),                  # x (N,D)
                  row(d),                  # condition (N,D)
                  resident(prepared["w1c"]), resident(prepared["w1s"]),
                  resident(prepared["b1"]),
                  resident(prepared["wfx"]), resident(prepared["wfy"]),
                  resident(prepared["wt2"]), resident(prepared["bfp"])],
        out_specs=row(d),                  # natural width D (full-extent last dim)
        compiler_params=pltpu.CompilerParams(
            dimension_semantics=("parallel",)),
    )(step_col, x, condition,
      prepared["w1c"], prepared["w1s"], prepared["b1"],
      prepared["wfx"], prepared["wfy"], prepared["wt2"], prepared["bfp"])

    return out if n_pad == n else out[:n]


# ---------------------------------------------------------------------------
# Deterministic parameter init (mimics nn.Linear uniform init).
# ---------------------------------------------------------------------------
def init_params(key, hidden_dim=HIDDEN_DIM, freq_dim=FREQ_DIM):
    def linear(k, fan_in, fan_out):
        kw, kb = jax.random.split(k)
        bound = 1.0 / math.sqrt(fan_in)
        w = jax.random.uniform(kw, (fan_in, fan_out), jnp.float32, -bound, bound)
        b = jax.random.uniform(kb, (1, fan_out), jnp.float32, -bound, bound)
        return w, b

    k1, k2, k3 = jax.random.split(key, 3)
    w1, b1 = linear(k1, freq_dim, hidden_dim)          # step_mlp linear #1
    w2, b2 = linear(k2, hidden_dim, hidden_dim)        # step_mlp linear #2
    wf, bf = linear(k3, 3 * hidden_dim, hidden_dim)    # FinalLayer.linear (3D -> D)
    return {
        "w1": w1, "b1": b1, "w2": w2, "b2": b2,
        # split the (3D, D) final weight by the cat order (x, y=condition, t)
        "wfx": wf[0 * hidden_dim:1 * hidden_dim],
        "wfy": wf[1 * hidden_dim:2 * hidden_dim],
        "wft": wf[2 * hidden_dim:3 * hidden_dim],
        "bf": bf,
    }


def timestep_embedding(step, dim=FREQ_DIM, max_period=10000.0):
    half = dim // 2
    freqs = jnp.exp(-math.log(max_period)
                    * jnp.arange(half, dtype=jnp.float32) / half)
    args = step.astype(jnp.float32)[:, None] * freqs[None, :]
    return jnp.concatenate([jnp.cos(args), jnp.sin(args)], axis=-1)


def reference_forward(x, condition, step, params):
    """Pure-JAX reference of the same math (for the correctness check)."""
    t_freq = timestep_embedding(step, FREQ_DIM)
    h = t_freq @ params["w1"] + params["b1"]
    h = h * jax.nn.sigmoid(h)
    t_emb = h @ params["w2"] + params["b2"]
    y_out = jnp.concatenate([x, condition, t_emb], axis=1)
    wf = jnp.concatenate([params["wfx"], params["wfy"], params["wft"]], axis=0)
    return y_out @ wf + params["bf"]


if __name__ == "__main__":
    key = jax.random.PRNGKey(0)
    kp, kx, kc, ks = jax.random.split(key, 4)

    params = init_params(kp)
    prepared = prepare_params(params)

    x = jax.random.normal(kx, (BATCH, HIDDEN_DIM), jnp.float32)          # noisy item emb
    condition = jax.random.normal(kc, (BATCH, HIDDEN_DIM), jnp.float32)  # condition emb
    step = jax.random.randint(ks, (BATCH,), 0, 1000).astype(jnp.float32) # diffusion step

    out = jax.block_until_ready(dreamrec_forward(x, condition, step, prepared))

    ref = reference_forward(x, condition, step, params)
    # Relaxed tolerance: in-kernel sin/cos range reduction at large (step*freq) args
    # plus the w2@wft / b2@wft reassociation differ from XLA by a few ulps.
    np.testing.assert_allclose(np.asarray(out), np.asarray(ref), rtol=1e-3, atol=1e-3)

    print("KERNEL_OK")
</pallas_src>

<mosaic_0001>
module attributes {stable_mosaic.version = 11 : i64} {
  func.func @_dreamrec_kernel(%arg0: i32, %arg1: memref<8x1xf32, #tpu.memory_space<vmem>>, %arg2: memref<8x32xf32, #tpu.memory_space<vmem>>, %arg3: memref<8x32xf32, #tpu.memory_space<vmem>>, %arg4: memref<128x32xf32, #tpu.memory_space<vmem>>, %arg5: memref<128x32xf32, #tpu.memory_space<vmem>>, %arg6: memref<1x32xf32, #tpu.memory_space<vmem>>, %arg7: memref<32x32xf32, #tpu.memory_space<vmem>>, %arg8: memref<32x32xf32, #tpu.memory_space<vmem>>, %arg9: memref<32x32xf32, #tpu.memory_space<vmem>>, %arg10: memref<1x32xf32, #tpu.memory_space<vmem>>, %arg11: memref<8x32xf32, #tpu.memory_space<vmem>>) attributes {dimension_semantics = [#tpu.dimension_semantics<parallel>], iteration_bounds = array<i64: 1>, scalar_prefetch = 0 : i64, scratch_operands = 0 : i64, tpu.core_type = #tpu.core_type<tc>, window_params = [{transform_indices = @transform_0, window_bounds = array<i64: 8, 1>}, {transform_indices = @transform_1, window_bounds = array<i64: 8, 32>}, {transform_indices = @transform_2, window_bounds = array<i64: 8, 32>}, {pipeline_mode = #tpu.pipeline_mode<synchronous>, transform_indices = @transform_3, window_bounds = array<i64: 128, 32>}, {pipeline_mode = #tpu.pipeline_mode<synchronous>, transform_indices = @transform_4, window_bounds = array<i64: 128, 32>}, {pipeline_mode = #tpu.pipeline_mode<synchronous>, transform_indices = @transform_5, window_bounds = array<i64: 1, 32>}, {pipeline_mode = #tpu.pipeline_mode<synchronous>, transform_indices = @transform_6, window_bounds = array<i64: 32, 32>}, {pipeline_mode = #tpu.pipeline_mode<synchronous>, transform_indices = @transform_7, window_bounds = array<i64: 32, 32>}, {pipeline_mode = #tpu.pipeline_mode<synchronous>, transform_indices = @transform_8, window_bounds = array<i64: 32, 32>}, {pipeline_mode = #tpu.pipeline_mode<synchronous>, transform_indices = @transform_9, window_bounds = array<i64: 1, 32>}, {transform_indices = @transform_10, window_bounds = array<i64: 8, 32>}]} {
    %0 = tpu.iota {dimensions = array<i32: 1>} : vector<1x128xi32>
    %1 = arith.sitofp %0 : vector<1x128xi32> to vector<1x128xf32>
    %cst = arith.constant -9.21034049 : f32
    %2 = vector.broadcast %cst : f32 to vector<1x128xf32>
    %3 = arith.mulf %2, %1 : vector<1x128xf32>
    %cst_0 = arith.constant 1.280000e+02 : f32
    %4 = vector.broadcast %cst_0 : f32 to vector<1x128xf32>
    %5 = arith.divf %3, %4 : vector<1x128xf32>
    %6 = math.exp %5 : vector<1x128xf32>
    %c0 = arith.constant 0 : index
    %c0_1 = arith.constant 0 : index
    %7 = vector.load %arg1[%c0, %c0_1] : memref<8x1xf32, #tpu.memory_space<vmem>>, vector<8x1xf32>
    %8 = vector.broadcast %7 : vector<8x1xf32> to vector<8x128xf32>
    %9 = vector.broadcast %6 : vector<1x128xf32> to vector<8x128xf32>
    %10 = arith.mulf %8, %9 : vector<8x128xf32>
    %11 = math.cos %10 : vector<8x128xf32>
    %c0_2 = arith.constant 0 : index
    %c0_3 = arith.constant 0 : index
    %12 = vector.load %arg4[%c0_2, %c0_3] : memref<128x32xf32, #tpu.memory_space<vmem>>, vector<128x32xf32>
    %cst_4 = arith.constant dense<0.000000e+00> : vector<8x32xf32>
    %13 = tpu.matmul %11, %12, %cst_4 {dimension_numbers = #tpu.dot_dimension_numbers<[1], [0], [0], [1], [0, 0, 1, 1], [], []>} : vector<8x128xf32>, vector<128x32xf32>, vector<8x32xf32> -> vector<8x32xf32>
    %14 = math.sin %10 : vector<8x128xf32>
    %c0_5 = arith.constant 0 : index
    %c0_6 = arith.constant 0 : index
    %15 = vector.load %arg5[%c0_5, %c0_6] : memref<128x32xf32, #tpu.memory_space<vmem>>, vector<128x32xf32>
    %cst_7 = arith.constant dense<0.000000e+00> : vector<8x32xf32>
    %16 = tpu.matmul %14, %15, %cst_7 {dimension_numbers = #tpu.dot_dimension_numbers<[1], [0], [0], [1], [0, 0, 1, 1], [], []>} : vector<8x128xf32>, vector<128x32xf32>, vector<8x32xf32> -> vector<8x32xf32>
    %17 = arith.addf %13, %16 : vector<8x32xf32>
    %c0_8 = arith.constant 0 : index
    %c0_9 = arith.constant 0 : index
    %18 = vector.load %arg6[%c0_8, %c0_9] : memref<1x32xf32, #tpu.memory_space<vmem>>, vector<1x32xf32>
    %19 = vector.broadcast %18 : vector<1x32xf32> to vector<8x32xf32>
    %20 = arith.addf %17, %19 : vector<8x32xf32>
    %21 = arith.negf %20 : vector<8x32xf32>
    %22 = math.exp %21 : vector<8x32xf32>
    %cst_10 = arith.constant 1.000000e+00 : f32
    %23 = vector.broadcast %cst_10 : f32 to vector<8x32xf32>
    %24 = arith.addf %23, %22 : vector<8x32xf32>
    %25 = arith.divf %23, %24 : vector<8x32xf32>
    %26 = arith.mulf %20, %25 : vector<8x32xf32>
    %c0_11 = arith.constant 0 : index
    %c0_12 = arith.constant 0 : index
    %27 = vector.load %arg2[%c0_11, %c0_12] : memref<8x32xf32, #tpu.memory_space<vmem>>, vector<8x32xf32>
    %c0_13 = arith.constant 0 : index
    %c0_14 = arith.constant 0 : index
    %28 = vector.load %arg7[%c0_13, %c0_14] : memref<32x32xf32, #tpu.memory_space<vmem>>, vector<32x32xf32>
    %cst_15 = arith.constant dense<0.000000e+00> : vector<8x32xf32>
    %29 = tpu.matmul %27, %28, %cst_15 {dimension_numbers = #tpu.dot_dimension_numbers<[1], [0], [0], [1], [0, 0, 1, 1], [], []>} : vector<8x32xf32>, vector<32x32xf32>, vector<8x32xf32> -> vector<8x32xf32>
    %c0_16 = arith.constant 0 : index
    %c0_17 = arith.constant 0 : index
    %30 = vector.load %arg3[%c0_16, %c0_17] : memref<8x32xf32, #tpu.memory_space<vmem>>, vector<8x32xf32>
    %c0_18 = arith.constant 0 : index
    %c0_19 = arith.constant 0 : index
    %31 = vector.load %arg8[%c0_18, %c0_19] : memref<32x32xf32, #tpu.memory_space<vmem>>, vector<32x32xf32>
    %cst_20 = arith.constant dense<0.000000e+00> : vector<8x32xf32>
    %32 = tpu.matmul %30, %31, %cst_20 {dimension_numbers = #tpu.dot_dimension_numbers<[1], [0], [0], [1], [0, 0, 1, 1], [], []>} : vector<8x32xf32>, vector<32x32xf32>, vector<8x32xf32> -> vector<8x32xf32>
    %33 = arith.addf %29, %32 : vector<8x32xf32>
    %c0_21 = arith.constant 0 : index
    %c0_22 = arith.constant 0 : index
    %34 = vector.load %arg9[%c0_21, %c0_22] : memref<32x32xf32, #tpu.memory_space<vmem>>, vector<32x32xf32>
    %cst_23 = arith.constant dense<0.000000e+00> : vector<8x32xf32>
    %35 = tpu.matmul %26, %34, %cst_23 {dimension_numbers = #tpu.dot_dimension_numbers<[1], [0], [0], [1], [0, 0, 1, 1], [], []>} : vector<8x32xf32>, vector<32x32xf32>, vector<8x32xf32> -> vector<8x32xf32>
    %36 = arith.addf %33, %35 : vector<8x32xf32>
    %c0_24 = arith.constant 0 : index
    %c0_25 = arith.constant 0 : index
    %37 = vector.load %arg10[%c0_24, %c0_25] : memref<1x32xf32, #tpu.memory_space<vmem>>, vector<1x32xf32>
    %38 = vector.broadcast %37 : vector<1x32xf32> to vector<8x32xf32>
    %39 = arith.addf %36, %38 : vector<8x32xf32>
    %c0_26 = arith.constant 0 : index
    %c0_27 = arith.constant 0 : index
    %40 = vector.load %arg11[%c0_26, %c0_27] : memref<8x32xf32, #tpu.memory_space<vmem>>, vector<8x32xf32>
    tpu.vector_store %arg11[%c0_26, %c0_27], %39 {strides = array<i32>} : memref<8x32xf32, #tpu.memory_space<vmem>>, vector<8x32xf32>,
    return
  }
  func.func @transform_0(%arg0: i32) -> (i32, i32) {
    %c0_i32 = arith.constant 0 : i32
    %c0_i32_0 = arith.constant 0 : i32
    return %arg0, %c0_i32 : i32, i32
  }
  func.func @transform_1(%arg0: i32) -> (i32, i32) {
    %c0_i32 = arith.constant 0 : i32
    %c0_i32_0 = arith.constant 0 : i32
    return %arg0, %c0_i32 : i32, i32
  }
  func.func @transform_2(%arg0: i32) -> (i32, i32) {
    %c0_i32 = arith.constant 0 : i32
    %c0_i32_0 = arith.constant 0 : i32
    return %arg0, %c0_i32 : i32, i32
  }
  func.func @transform_3(%arg0: i32) -> (i32, i32) {
    %c0_i32 = arith.constant 0 : i32
    %c0_i32_0 = arith.constant 0 : i32
    %c0_i32_1 = arith.constant 0 : i32
    return %c0_i32, %c0_i32_0 : i32, i32
  }
  func.func @transform_4(%arg0: i32) -> (i32, i32) {
    %c0_i32 = arith.constant 0 : i32
    %c0_i32_0 = arith.constant 0 : i32
    %c0_i32_1 = arith.constant 0 : i32
    return %c0_i32, %c0_i32_0 : i32, i32
  }
  func.func @transform_5(%arg0: i32) -> (i32, i32) {
    %c0_i32 = arith.constant 0 : i32
    %c0_i32_0 = arith.constant 0 : i32
    %c0_i32_1 = arith.constant 0 : i32
    return %c0_i32, %c0_i32_0 : i32, i32
  }
  func.func @transform_6(%arg0: i32) -> (i32, i32) {
    %c0_i32 = arith.constant 0 : i32
    %c0_i32_0 = arith.constant 0 : i32
    %c0_i32_1 = arith.constant 0 : i32
    return %c0_i32, %c0_i32_0 : i32, i32
  }
  func.func @transform_7(%arg0: i32) -> (i32, i32) {
    %c0_i32 = arith.constant 0 : i32
    %c0_i32_0 = arith.constant 0 : i32
    %c0_i32_1 = arith.constant 0 : i32
    return %c0_i32, %c0_i32_0 : i32, i32
  }
  func.func @transform_8(%arg0: i32) -> (i32, i32) {
    %c0_i32 = arith.constant 0 : i32
    %c0_i32_0 = arith.constant 0 : i32
    %c0_i32_1 = arith.constant 0 : i32
    return %c0_i32, %c0_i32_0 : i32, i32
  }
  func.func @transform_9(%arg0: i32) -> (i32, i32) {
    %c0_i32 = arith.constant 0 : i32
    %c0_i32_0 = arith.constant 0 : i32
    %c0_i32_1 = arith.constant 0 : i32
    return %c0_i32, %c0_i32_0 : i32, i32
  }
  func.func @transform_10(%arg0: i32) -> (i32, i32) {
    %c0_i32 = arith.constant 0 : i32
    %c0_i32_0 = arith.constant 0 : i32
    return %arg0, %c0_i32 : i32, i32
  }
}

</mosaic_0001>

<llo_original>
// kernel: dreamrec_forward.1
$region0: #{dreamrec_forward.1}
  #allocation0 [shape = 'u32[]', space=smem, size = 0x4, offset = 0x4, fixed_abs, tag = 'smem constant byte address 0x4 - core index']
  #allocation1 [shape = 'u32[72,128]{1,0:T(1,128)}', space=vmem, size = 0x9000, scoped, tag = 'internal scratch']
  %s0 = inlined_call_operand.vmem [shape: f32[8,1], index: 0, kind: input, shape index: {}]
  %s1 = inlined_call_operand.vmem [shape: f32[8,32], index: 1, kind: input, shape index: {}]
  %s2 = inlined_call_operand.vmem [shape: f32[8,32], index: 2, kind: input, shape index: {}]
  %s3 = inlined_call_operand.vmem [shape: f32[128,32], index: 3, kind: input, shape index: {}]
  %s4 = inlined_call_operand.vmem [shape: f32[128,32], index: 4, kind: input, shape index: {}]
  %s5 = inlined_call_operand.vmem [shape: f32[1,32], index: 5, kind: input, shape index: {}]
  %s6 = inlined_call_operand.vmem [shape: f32[32,32], index: 6, kind: input, shape index: {}]
  %s7 = inlined_call_operand.vmem [shape: f32[32,32], index: 7, kind: input, shape index: {}]
  %s8 = inlined_call_operand.vmem [shape: f32[32,32], index: 8, kind: input, shape index: {}]
  %s9 = inlined_call_operand.vmem [shape: f32[1,32], index: 9, kind: input, shape index: {}]
  %s10 = inlined_call_operand.hbm [shape: f32[8,32], index: 10, kind: output, shape index: {}]
  %s11 = sld [smem:[#allocation0]]
  $region50: #{dreamrec_forward.1} parent=0
    _
  %s13 = ssub.s32 1, %s11
  %s14 = scalar_select 0, %s13, %s11
  $region1: #{dreamrec_forward.1} parent=0
    #allocation2 [shape = 'u8[4096]{0}', space=vmem, size = 0x1000, scoped, tag = 'output window, operand 0, single buffered']
    #allocation3 [shape = 's32[1]{0}', space=sflag, size = 0x4, scoped, tag = 'scoped memory for dreamrec_forward.1']
    %15 = vsyncpa [#allocation3], 0
    // Predicated region
    $region2: #{dreamrec_forward.1} parent=1 // pred_check
      _
    $region3: #{dreamrec_forward.1} parent=1 // pred_check_branch
      %17 = sbr.rel (0) target = $region5
    $region4: #{dreamrec_forward.1} parent=1 // pred_region
      _
    $region5: #{dreamrec_forward.1} parent=1 // pred_fallthru
      _
    // Predicated region
    $region6: #{dreamrec_forward.1} parent=1 // pred_check
      _
    $region7: #{dreamrec_forward.1} parent=1 // pred_check_branch
      %19 = sbr.rel (0) target = $region9
    $region8: #{dreamrec_forward.1} parent=1 // pred_region
      _
    $region9: #{dreamrec_forward.1} parent=1 // pred_fallthru
      _
    // Predicated region
    $region10: #{dreamrec_forward.1} parent=1 // pred_check
      _
    $region11: #{dreamrec_forward.1} parent=1 // pred_check_branch
      %21 = sbr.rel (0) target = $region13
    $region12: #{dreamrec_forward.1} parent=1 // pred_region
      _
    $region13: #{dreamrec_forward.1} parent=1 // pred_fallthru
      _
    // Predicated region
    $region14: #{dreamrec_forward.1} parent=1 // pred_check
      _
    $region15: #{dreamrec_forward.1} parent=1 // pred_check_branch
      %23 = sbr.rel (0) target = $region17
    $region16: #{dreamrec_forward.1} parent=1 // pred_region
      _
    $region17: #{dreamrec_forward.1} parent=1 // pred_fallthru
      _
    // Predicated region
    $region18: #{dreamrec_forward.1} parent=1 // pred_check
      _
    $region19: #{dreamrec_forward.1} parent=1 // pred_check_branch
      %25 = sbr.rel (0) target = $region21
    $region20: #{dreamrec_forward.1} parent=1 // pred_region
      _
    $region21: #{dreamrec_forward.1} parent=1 // pred_fallthru
      _
    // Predicated region
    $region22: #{dreamrec_forward.1} parent=1 // pred_check
      _
    $region23: #{dreamrec_forward.1} parent=1 // pred_check_branch
      %27 = sbr.rel (0) target = $region25
    $region24: #{dreamrec_forward.1} parent=1 // pred_region
      _
    $region25: #{dreamrec_forward.1} parent=1 // pred_fallthru
      _
    // Predicated region
    $region26: #{dreamrec_forward.1} parent=1 // pred_check
      _
    $region27: #{dreamrec_forward.1} parent=1 // pred_check_branch
      %29 = sbr.rel (0) target = $region29
    $region28: #{dreamrec_forward.1} parent=1 // pred_region
      _
    $region29: #{dreamrec_forward.1} parent=1 // pred_fallthru
      _
    // Predicated region
    $region30: #{dreamrec_forward.1} parent=1 // pred_check
      _
    $region31: #{dreamrec_forward.1} parent=1 // pred_check_branch
      %31 = sbr.rel (0) target = $region33
    $region32: #{dreamrec_forward.1} parent=1 // pred_region
      _
    $region33: #{dreamrec_forward.1} parent=1 // pred_fallthru
      _
    // Predicated region
    $region34: #{dreamrec_forward.1} parent=1 // pred_check
      _
    $region35: #{dreamrec_forward.1} parent=1 // pred_check_branch
      %33 = sbr.rel (0) target = $region37
    $region36: #{dreamrec_forward.1} parent=1 // pred_region
      _
    $region37: #{dreamrec_forward.1} parent=1 // pred_fallthru
      _
    // Predicated region
    $region38: #{dreamrec_forward.1} parent=1 // pred_check
      _
    $region39: #{dreamrec_forward.1} parent=1 // pred_check_branch
      %35 = sbr.rel (0) target = $region41
    $region40: #{dreamrec_forward.1} parent=1 // pred_region
      _
    $region41: #{dreamrec_forward.1} parent=1 // pred_fallthru
      _
    %v36 = vlaneseq
    %v37 = vand.u32 %v36, 127
    %v38 = vcvt.s32.f32 %v37
    %v39 = vmul.f32 %v38, -9.2103405
    %v40 = vrcp.pop 128.0
    %v41 = vmul.f32 128.0, %v40
    %v42 = vsub.f32 1.0, %v41
    %v43 = vmul.f32 %v40, %v42
    %v44 = vadd.f32 %v40, %v43
    %vm45 = vweird.f32 %v40
    %v46 = vsel %vm45, %v40, %v44
    %v47 = vmul.f32 %v39, %v46
    %v48 = vmul.f32 %v47, 1.442695
    %v49 = vpow.pop %v48
    %v50 = vld [vmem:[%s0] sm:$0xff]
    %52 = vset.pattern.permute.xlu0 0
    %53 = vperm.xlu0 %52, %v50
    %v54 = vpop.permute.xlu0 %53
    %v56 = vmul.f32 %v54, %v49
    %v57 = vand.u32 2147483647, %v56
    %vm58 = vcmp.le.f32.partialorder %v57, 0.7853982
    %vm59 = vcmp.lt.s32.totalorder %v56, 0
    %v60 = vand.u32 %v56, 2139095040
    %v61 = vshrl.u32 %v60, 23
    %v62 = vsub.s32 %v61, 127
    %v63 = vand.u32 2147483647, %v56
    %v64 = vand.u32 %v63, 8388607
    %v65 = vor.u32 %v64, 8388608
    %v66 = vsub.s32 0, %v65
    %v67 = vadd.s32 %v62, 1
    %vm68 = vcmp.gt.s32.totalorder %v67, 0
    %v69 = vsel %vm68, %v67, 0
    %v70 = vshrl.u32 %v69, 5
    %v71 = vand.u32 %v69, 31
    %v72 = vsub.s32 32, %v71
    %v73 = vshrl.u32 683565275, %v72
    %v74 = vshll.u32 683565275, %v71
    %v75 = vshrl.u32 2475754826, %v72
    %v76 = vor.u32 %v74, %v75
    %v77 = vshll.u32 2475754826, %v71
    %v78 = vshrl.u32 2131351028, %v72
    %v79 = vor.u32 %v77, %v78
    %v80 = vshll.u32 2131351028, %v71
    %v81 = vshrl.u32 2102212464, %v72
    %v82 = vor.u32 %v80, %v81
    %v83 = vshll.u32 2102212464, %v71
    %v84 = vshrl.u32 920167782, %v72
    %v85 = vor.u32 %v83, %v84
    %v86 = vshll.u32 920167782, %v71
    %v87 = vshrl.u32 1326507024, %v72
    %v88 = vor.u32 %v86, %v87
    %vm89 = vcmp.lt.s32.totalorder %v70, 1
    %vm90 = vcmp.lt.s32.totalorder %v70, 2
    %vm91 = vcmp.lt.s32.totalorder %v70, 3
    %vm92 = vcmp.lt.s32.totalorder %v70, 4
    %v93 = vsel %vm89, %v73, %v76
    %v94 = vsel %vm92, %v82, 2102212464
    %v95 = vsel %vm91, %v79, %v94
    %v96 = vsel %vm90, %v93, %v95
    %v97 = vsel %vm89, %v76, %v79
    %v98 = vsel %vm92, %v85, 920167782
    %v99 = vsel %vm91, %v82, %v98
    %v100 = vsel %vm90, %v97, %v99
    %v101 = vsel %vm89, %v79, %v82
    %v102 = vsel %vm92, %v88, 1326507024
    %v103 = vsel %vm91, %v85, %v102
    %v104 = vsel %vm90, %v101, %v103
    %v105 = vshll.u32 %v65, 8
    %v106 = vand.u32 %v105, 65535
    %v107 = vshrl.u32 %v105, 16
    %v108 = vand.u32 %v104, 65535
    %v109 = vshrl.u32 %v104, 16
    %v110 = vmul.u32 %v106, %v108
    %v111 = vmul.u32 %v106, %v109
    %v112 = vmul.u32 %v107, %v108
    %v113 = vmul.u32 %v107, %v109
    %v114 = vshll.u32 %v111, 16
    %v115 = vshrl.u32 %v111, 16
    %v116 = vshll.u32 %v112, 16
    %v117 = vshrl.u32 %v112, 16
    %vm118 = vc.u32 %v110, %v114
    %v119 = vsel %vm118, 1, 0
    %v120 = vadd.s32 %v110, %v114
    %v121 = vadd.s32 %v113, %v119
    %vm122 = vc.u32 %v120, %v116
    %v123 = vsel %vm122, 1, 0
    %v124 = vadd.s32 %v120, %v116
    %v125 = vadd.s32 %v121, %v123
    %v126 = vadd.s32 %v125, %v115
    %v127 = vadd.s32 %v126, %v117
    %v128 = vand.u32 %v105, 65535
    %v129 = vshrl.u32 %v105, 16
    %v130 = vand.u32 %v100, 65535
    %v131 = vshrl.u32 %v100, 16
    %v132 = vmul.u32 %v128, %v130
    %v133 = vmul.u32 %v128, %v131
    %v134 = vmul.u32 %v129, %v130
    %v135 = vmul.u32 %v129, %v131
    %v136 = vshll.u32 %v133, 16
    %v137 = vshrl.u32 %v133, 16
    %v138 = vshll.u32 %v134, 16
    %v139 = vshrl.u32 %v134, 16
    %vm140 = vc.u32 %v132, %v136
    %v141 = vsel %vm140, 1, 0
    %v142 = vadd.s32 %v132, %v136
    %v143 = vadd.s32 %v135, %v141
    %vm144 = vc.u32 %v142, %v138
    %v145 = vsel %vm144, 1, 0
    %v146 = vadd.s32 %v142, %v138
    %v147 = vadd.s32 %v143, %v145
    %v148 = vadd.s32 %v147, %v137
    %v149 = vadd.s32 %v148, %v139
    %v150 = vmul.u32 %v105, %v96
    %v151 = vadd.s32 %v127, %v146
    %vm152 = vc.u32 %v127, %v146
    %v153 = vadd.s32 %v149, 1
    %v154 = vsel %vm152, %v153, %v149
    %v155 = vadd.s32 %v150, %v154
    %v156 = vadd.s32 %v155, 536870912
    %v157 = vshrl.u32 %v156, 30
    %v158 = vshll.u32 %v157, 30
    %v159 = vsub.s32 %v155, %v158
    %vm160 = vcmp.lt.s32.totalorder %v159, 0
    %v161 = vsub.s32 0, %v159
    %v162 = vsel %vm160, %v161, %v159
    %v163 = vclz %v162
    %v164 = vsub.s32 %v163, 2
    %vm165 = vcmp.gt.s32.totalorder 0, %v164
    %v166 = vsel %vm165, 0, %v164
    %v167 = vsub.s32 32, %v166
    %v168 = vshll.u32 %v159, %v166
    %v169 = vshrl.u32 %v151, %v167
    %v170 = vor.u32 %v168, %v169
    %v171 = vsub.s32 4294967266, %v166
    %v172 = vadd.s32 %v171, 127
    %v173 = vshll.u32 %v172, 23
    %v174 = vor.u32 4788187, %v173
    %v175 = vand.u32 2147483647, %v174
    %v177 = vcvt.s32.f32 %v170
    %v178 = vmul.f32 %v177, %v175
    %v179 = vxor.u32 %v178, 2147483648
    %v180 = vsel %vm59, %v179, %v178
    %v181 = vsub.s32 4, %v157
    %v182 = vsel %vm59, %v181, %v157
    %v183 = vsel %vm58, %v56, %v180
    %v184 = vsel %vm58, 0, %v182
    %v185 = vmul.f32 %v183, %v183
    %v186 = vmul.f32 %v185, -0.001358992
    %v187 = vadd.f32 %v186, 0.041655596
    %v188 = vmul.f32 %v185, %v187
    %v189 = vadd.f32 %v188, -0.4999988
    %v190 = vmul.f32 %v185, %v189
    %v191 = vadd.f32 1.0, %v190
    %v192 = vmul.f32 %v183, %v183
    %v193 = vmul.f32 %v192, -0.00019511016
    %v194 = vadd.f32 %v193, 0.008332121
    %v195 = vmul.f32 %v192, %v194
    %v196 = vadd.f32 %v195, -0.16666654
    %v197 = vmul.f32 %v192, %v196
    %v198 = vadd.f32 %v197, 1.0
    %v199 = vmul.f32 %v198, %v183
    %vm200 = vweird.f32 %v56
    %v201 = vand.u32 %v184, 3
    %vm202 = vcmp.lt.s32.totalorder %v201, 2
    %vm203 = vcmp.eq.s32.totalorder %v201, 0
    %v204 = vxor.u32 %v199, 2147483648
    %v205 = vsel %vm203, %v191, %v204
    %vm206 = vcmp.eq.s32.totalorder %v201, 2
    %v207 = vxor.u32 %v191, 2147483648
    %v208 = vsel %vm206, %v207, %v199
    %v209 = vsel %vm202, %v205, %v208
    %v210 = vsel %vm200, nan, %v209
    %v211 = vld [vmem:[%s3] sm:$0xff]
    %v212 = vld [vmem:[%s3 + $0x8] sm:$0xff]
    %v213 = vld [vmem:[%s3 + $0x10] sm:$0xff]
    %v214 = vld [vmem:[%s3 + $0x18] sm:$0xff]
    %v215 = vld [vmem:[%s3 + $0x20] sm:$0xff]
    %v216 = vld [vmem:[%s3 + $0x28] sm:$0xff]
    %v217 = vld [vmem:[%s3 + $0x30] sm:$0xff]
    %v218 = vld [vmem:[%s3 + $0x38] sm:$0xff]
    %v219 = vld [vmem:[%s3 + $0x40] sm:$0xff]
    %v220 = vld [vmem:[%s3 + $0x48] sm:$0xff]
    %v221 = vld [vmem:[%s3 + $0x50] sm:$0xff]
    %v222 = vld [vmem:[%s3 + $0x58] sm:$0xff]
    %v223 = vld [vmem:[%s3 + $0x60] sm:$0xff]
    %v224 = vld [vmem:[%s3 + $0x68] sm:$0xff]
    %v225 = vld [vmem:[%s3 + $0x70] sm:$0xff]
    %v226 = vld [vmem:[%s3 + $0x78] sm:$0xff]
    %v227 = vand.u32 2147483647, %v56
    %vm228 = vcmp.le.f32.partialorder %v227, 0.7853982
    %vm229 = vcmp.lt.s32.totalorder %v56, 0
    %v230 = vand.u32 %v56, 2139095040
    %v231 = vshrl.u32 %v230, 23
    %v232 = vsub.s32 %v231, 127
    %v233 = vand.u32 2147483647, %v56
    %v234 = vand.u32 %v233, 8388607
    %v235 = vor.u32 %v234, 8388608
    %v236 = vsub.s32 0, %v235
    %v237 = vadd.s32 %v232, 1
    %vm238 = vcmp.gt.s32.totalorder %v237, 0
    %v239 = vsel %vm238, %v237, 0
    %v240 = vshrl.u32 %v239, 5
    %v241 = vand.u32 %v239, 31
    %v242 = vsub.s32 32, %v241
    %v243 = vshrl.u32 683565275, %v242
    %v244 = vshll.u32 683565275, %v241
    %v245 = vshrl.u32 2475754826, %v242
    %v246 = vor.u32 %v244, %v245
    %v247 = vshll.u32 2475754826, %v241
    %v248 = vshrl.u32 2131351028, %v242
    %v249 = vor.u32 %v247, %v248
    %v250 = vshll.u32 2131351028, %v241
    %v251 = vshrl.u32 2102212464, %v242
    %v252 = vor.u32 %v250, %v251
    %v253 = vshll.u32 2102212464, %v241
    %v254 = vshrl.u32 920167782, %v242
    %v255 = vor.u32 %v253, %v254
    %v256 = vshll.u32 920167782, %v241
    %v257 = vshrl.u32 1326507024, %v242
    %v258 = vor.u32 %v256, %v257
    %vm259 = vcmp.lt.s32.totalorder %v240, 1
    %vm260 = vcmp.lt.s32.totalorder %v240, 2
    %vm261 = vcmp.lt.s32.totalorder %v240, 3
    %vm262 = vcmp.lt.s32.totalorder %v240, 4
    %v263 = vsel %vm259, %v243, %v246
    %v264 = vsel %vm262, %v252, 2102212464
    %v265 = vsel %vm261, %v249, %v264
    %v266 = vsel %vm260, %v263, %v265
    %v267 = vsel %vm259, %v246, %v249
    %v268 = vsel %vm262, %v255, 920167782
    %v269 = vsel %vm261, %v252, %v268
    %v270 = vsel %vm260, %v267, %v269
    %v271 = vsel %vm259, %v249, %v252
    %v272 = vsel %vm262, %v258, 1326507024
    %v273 = vsel %vm261, %v255, %v272
    %v274 = vsel %vm260, %v271, %v273
    %v275 = vshll.u32 %v235, 8
    %v276 = vand.u32 %v275, 65535
    %v277 = vshrl.u32 %v275, 16
    %v278 = vand.u32 %v274, 65535
    %v279 = vshrl.u32 %v274, 16
    %v280 = vmul.u32 %v276, %v278
    %v281 = vmul.u32 %v276, %v279
    %v282 = vmul.u32 %v277, %v278
    %v283 = vmul.u32 %v277, %v279
    %v284 = vshll.u32 %v281, 16
    %v285 = vshrl.u32 %v281, 16
    %v286 = vshll.u32 %v282, 16
    %v287 = vshrl.u32 %v282, 16
    %vm288 = vc.u32 %v280, %v284
    %v289 = vsel %vm288, 1, 0
    %v290 = vadd.s32 %v280, %v284
    %v291 = vadd.s32 %v283, %v289
    %vm292 = vc.u32 %v290, %v286
    %v293 = vsel %vm292, 1, 0
    %v294 = vadd.s32 %v290, %v286
    %v295 = vadd.s32 %v291, %v293
    %v296 = vadd.s32 %v295, %v285
    %v297 = vadd.s32 %v296, %v287
    %v298 = vand.u32 %v275, 65535
    %v299 = vshrl.u32 %v275, 16
    %v300 = vand.u32 %v270, 65535
    %v301 = vshrl.u32 %v270, 16
    %v302 = vmul.u32 %v298, %v300
    %v303 = vmul.u32 %v298, %v301
    %v304 = vmul.u32 %v299, %v300
    %v305 = vmul.u32 %v299, %v301
    %v306 = vshll.u32 %v303, 16
    %v307 = vshrl.u32 %v303, 16
    %v308 = vshll.u32 %v304, 16
    %v309 = vshrl.u32 %v304, 16
    %vm310 = vc.u32 %v302, %v306
    %v311 = vsel %vm310, 1, 0
    %v312 = vadd.s32 %v302, %v306
    %v313 = vadd.s32 %v305, %v311
    %vm314 = vc.u32 %v312, %v308
    %v315 = vsel %vm314, 1, 0
    %v316 = vadd.s32 %v312, %v308
    %v317 = vadd.s32 %v313, %v315
    %v318 = vadd.s32 %v317, %v307
    %v319 = vadd.s32 %v318, %v309
    %v320 = vmul.u32 %v275, %v266
    %v321 = vadd.s32 %v297, %v316
    %vm322 = vc.u32 %v297, %v316
    %v323 = vadd.s32 %v319, 1
    %v324 = vsel %vm322, %v323, %v319
    %v325 = vadd.s32 %v320, %v324
    %v326 = vadd.s32 %v325, 536870912
    %v327 = vshrl.u32 %v326, 30
    %v328 = vshll.u32 %v327, 30
    %v329 = vsub.s32 %v325, %v328
    %vm330 = vcmp.lt.s32.totalorder %v329, 0
    %v331 = vsub.s32 0, %v329
    %v332 = vsel %vm330, %v331, %v329
    %v333 = vclz %v332
    %v334 = vsub.s32 %v333, 2
    %vm335 = vcmp.gt.s32.totalorder 0, %v334
    %v336 = vsel %vm335, 0, %v334
    %v337 = vsub.s32 32, %v336
    %v338 = vshll.u32 %v329, %v336
    %v339 = vshrl.u32 %v321, %v337
    %v340 = vor.u32 %v338, %v339
    %v341 = vsub.s32 4294967266, %v336
    %v342 = vadd.s32 %v341, 127
    %v343 = vshll.u32 %v342, 23
    %v344 = vor.u32 4788187, %v343
    %v345 = vand.u32 2147483647, %v344
    %v347 = vcvt.s32.f32 %v340
    %v348 = vmul.f32 %v347, %v345
    %v349 = vxor.u32 %v348, 2147483648
    %v350 = vsel %vm229, %v349, %v348
    %v351 = vsub.s32 4, %v327
    %v352 = vsel %vm229, %v351, %v327
    %v353 = vsel %vm228, %v56, %v350
    %v354 = vsel %vm228, 0, %v352
    %v355 = vmul.f32 %v353, %v353
    %v356 = vmul.f32 %v355, -0.001358992
    %v357 = vadd.f32 %v356, 0.041655596
    %v358 = vmul.f32 %v355, %v357
    %v359 = vadd.f32 %v358, -0.4999988
    %v360 = vmul.f32 %v355, %v359
    %v361 = vadd.f32 1.0, %v360
    %v362 = vmul.f32 %v353, %v353
    %v363 = vmul.f32 %v362, -0.00019511016
    %v364 = vadd.f32 %v363, 0.008332121
    %v365 = vmul.f32 %v362, %v364
    %v366 = vadd.f32 %v365, -0.16666654
    %v367 = vmul.f32 %v362, %v366
    %v368 = vadd.f32 %v367, 1.0
    %v369 = vmul.f32 %v368, %v353
    %vm370 = vweird.f32 %v56
    %v371 = vadd.s32 %v354, 3
    %v372 = vand.u32 %v371, 3
    %vm373 = vcmp.lt.s32.totalorder %v372, 2
    %vm374 = vcmp.eq.s32.totalorder %v372, 0
    %v375 = vxor.u32 %v369, 2147483648
    %v376 = vsel %vm374, %v361, %v375
    %vm377 = vcmp.eq.s32.totalorder %v372, 2
    %v378 = vxor.u32 %v361, 2147483648
    %v379 = vsel %vm377, %v378, %v369
    %v380 = vsel %vm373, %v376, %v379
    %v381 = vsel %vm370, nan, %v380
    %v382 = vld [vmem:[%s4] sm:$0xff]
    %v383 = vld [vmem:[%s4 + $0x8] sm:$0xff]
    %v384 = vld [vmem:[%s4 + $0x10] sm:$0xff]
    %v385 = vld [vmem:[%s4 + $0x18] sm:$0xff]
    %v386 = vld [vmem:[%s4 + $0x20] sm:$0xff]
    %v387 = vld [vmem:[%s4 + $0x28] sm:$0xff]
    %v388 = vld [vmem:[%s4 + $0x30] sm:$0xff]
    %v389 = vld [vmem:[%s4 + $0x38] sm:$0xff]
    %v390 = vld [vmem:[%s4 + $0x40] sm:$0xff]
    %v391 = vld [vmem:[%s4 + $0x48] sm:$0xff]
    %v392 = vld [vmem:[%s4 + $0x50] sm:$0xff]
    %v393 = vld [vmem:[%s4 + $0x58] sm:$0xff]
    %v394 = vld [vmem:[%s4 + $0x60] sm:$0xff]
    %v395 = vld [vmem:[%s4 + $0x68] sm:$0xff]
    %v396 = vld [vmem:[%s4 + $0x70] sm:$0xff]
    %v397 = vld [vmem:[%s4 + $0x78] sm:$0xff]
    %398 = vmatpush.msra.mxu0 %v397
    %399 = vmatpush.msra.mxu0 %v396
    %400 = vmatpush.msra.mxu0 %v395
    %401 = vmatpush.msra.mxu0 %v394
    %402 = vmatpush.msra.mxu0 %v393
    %403 = vmatpush.msra.mxu0 %v392
    %404 = vmatpush.msra.mxu0 %v391
    %405 = vmatpush.msra.mxu0 %v390
    %406 = vmatpush.msra.mxu0 %v389
    %407 = vmatpush.msra.mxu0 %v388
    %408 = vmatpush.msra.mxu0 %v387
    %409 = vmatpush.msra.mxu0 %v386
    %410 = vmatpush.msra.mxu0 %v385
    %411 = vmatpush.msra.mxu0 %v384
    %412 = vmatpush.msra.mxu0 %v383
    %413 = vmatpush.msra.mxu0 %v382
    %414 = vmatmul.f32.gmra.mxu0 %v381
    %v415 = vpop.f32.mrf.mxu0
    %v416 = vadd.f32 0.0, %v415
    %417 = vdwg.mxu0
    %418 = vmatpush.msra.mxu0 %v226
    %419 = vmatpush.msra.mxu0 %v225
    %420 = vmatpush.msra.mxu0 %v224
    %421 = vmatpush.msra.mxu0 %v223
    %422 = vmatpush.msra.mxu0 %v222
    %423 = vmatpush.msra.mxu0 %v221
    %424 = vmatpush.msra.mxu0 %v220
    %425 = vmatpush.msra.mxu0 %v219
    %426 = vmatpush.msra.mxu0 %v218
    %427 = vmatpush.msra.mxu0 %v217
    %428 = vmatpush.msra.mxu0 %v216
    %429 = vmatpush.msra.mxu0 %v215
    %430 = vmatpush.msra.mxu0 %v214
    %431 = vmatpush.msra.mxu0 %v213
    %432 = vmatpush.msra.mxu0 %v212
    %433 = vmatpush.msra.mxu0 %v211
    %434 = vmatmul.f32.gmra.mxu0 %v210
    %v435 = vpop.f32.mrf.mxu0
    %v436 = vadd.f32 %v416, %v435
    %437 = vdwg.mxu0
    %v438 = vld [vmem:[%s5] sm:$0x1]
    %v440 = vperm.slane %v438, 0
    %v442 = vadd.f32 %v436, %v440
    %v443 = vxor.u32 %v442, 2147483648
    %v444 = vmul.f32 %v443, 1.442695
    %v445 = vpow.pop %v444
    %v446 = vadd.f32 %v445, 1.0
    %v447 = vrcp.pop %v446
    %v448 = vmul.f32 %v446, %v447
    %v449 = vsub.f32 1.0, %v448
    %v450 = vmul.f32 %v447, %v449
    %v451 = vadd.f32 %v447, %v450
    %vm452 = vweird.f32 %v446
    %vm453 = vweird.f32 %v447
    %vm454 = vmor %vm452, %vm453
    %v455 = vsel %vm454, %v447, %v451
    %v456 = vand.u32 2147483647, %v446
    %vm457 = vcmp.eq.f32.partialorder %v456, 8.507059e+37
    %v458 = vand.u32 %v446, 2147483648
    %v459 = vor.u32 1.1754944e-38, %v458
    %v460 = vsel %vm457, %v459, %v455
    %v461 = vmul.f32 1.0, %v460
    %v462 = vmul.f32 %v442, %v461
    %v463 = vld [vmem:[%s1] sm:$0xff]
    %v464 = vld [vmem:[%s6] sm:$0xff]
    %v465 = vld [vmem:[%s6 + $0x8] sm:$0xff]
    %v466 = vld [vmem:[%s6 + $0x10] sm:$0xff]
    %v467 = vld [vmem:[%s6 + $0x18] sm:$0xff]
    %v468 = vld [vmem:[%s2] sm:$0xff]
    %v469 = vld [vmem:[%s7] sm:$0xff]
    %v470 = vld [vmem:[%s7 + $0x8] sm:$0xff]
    %v471 = vld [vmem:[%s7 + $0x10] sm:$0xff]
    %v472 = vld [vmem:[%s7 + $0x18] sm:$0xff]
    %vm473 = vcmask 261120
    %v475 = vsel %vm473, %v468, 0
    %477 = vmatpush.msra.mxu0 0.0
    %478 = vmatpush.msra.mxu0 0.0
    %479 = vmatpush.msra.mxu0 0.0
    %480 = vmatpush.msra.mxu0 0.0
    %481 = vmatpush.msra.mxu0 0.0
    %482 = vmatpush.msra.mxu0 0.0
    %483 = vmatpush.msra.mxu0 0.0
    %484 = vmatpush.msra.mxu0 0.0
    %485 = vmatpush.msra.mxu0 0.0
    %486 = vmatpush.msra.mxu0 0.0
    %487 = vmatpush.msra.mxu0 0.0
    %488 = vmatpush.msra.mxu0 0.0
    %489 = vmatpush.msra.mxu0 %v472
    %490 = vmatpush.msra.mxu0 %v471
    %491 = vmatpush.msra.mxu0 %v470
    %492 = vmatpush.msra.mxu0 %v469
    %493 = vmatmul.f32.gmra.mxu0 %v475
    %v494 = vpop.f32.mrf.mxu0
    %v495 = vadd.f32 0.0, %v494
    %496 = vdwg.mxu0
    %v498 = vsel %vm473, %v463, 0
    %500 = vmatpush.msra.mxu0 0.0
    %501 = vmatpush.msra.mxu0 0.0
    %502 = vmatpush.msra.mxu0 0.0
    %503 = vmatpush.msra.mxu0 0.0
    %504 = vmatpush.msra.mxu0 0.0
    %505 = vmatpush.msra.mxu0 0.0
    %506 = vmatpush.msra.mxu0 0.0
    %507 = vmatpush.msra.mxu0 0.0
    %508 = vmatpush.msra.mxu0 0.0
    %509 = vmatpush.msra.mxu0 0.0
    %510 = vmatpush.msra.mxu0 0.0
    %511 = vmatpush.msra.mxu0 0.0
    %512 = vmatpush.msra.mxu0 %v467
    %513 = vmatpush.msra.mxu0 %v466
    %514 = vmatpush.msra.mxu0 %v465
    %515 = vmatpush.msra.mxu0 %v464
    %516 = vmatmul.f32.gmra.mxu0 %v498
    %v517 = vpop.f32.mrf.mxu0
    %v518 = vadd.f32 %v495, %v517
    %519 = vdwg.mxu0
    %v520 = vld [vmem:[%s8] sm:$0xff]
    %v521 = vld [vmem:[%s8 + $0x8] sm:$0xff]
    %v522 = vld [vmem:[%s8 + $0x10] sm:$0xff]
    %v523 = vld [vmem:[%s8 + $0x18] sm:$0xff]
    %v525 = vsel %vm473, %v462, 0
    %527 = vmatpush.msra.mxu0 0.0
    %528 = vmatpush.msra.mxu0 0.0
    %529 = vmatpush.msra.mxu0 0.0
    %530 = vmatpush.msra.mxu0 0.0
    %531 = vmatpush.msra.mxu0 0.0
    %532 = vmatpush.msra.mxu0 0.0
    %533 = vmatpush.msra.mxu0 0.0
    %534 = vmatpush.msra.mxu0 0.0
    %535 = vmatpush.msra.mxu0 0.0
    %536 = vmatpush.msra.mxu0 0.0
    %537 = vmatpush.msra.mxu0 0.0
    %538 = vmatpush.msra.mxu0 0.0
    %539 = vmatpush.msra.mxu0 %v523
    %540 = vmatpush.msra.mxu0 %v522
    %541 = vmatpush.msra.mxu0 %v521
    %542 = vmatpush.msra.mxu0 %v520
    %543 = vmatmul.f32.gmra.mxu0 %v525
    %v544 = vpop.f32.mrf.mxu0
    %v545 = vadd.f32 0.0, %v544
    %546 = vdwg.mxu0
    %v547 = vadd.f32 %v518, %v545
    %v548 = vld [vmem:[%s9] sm:$0x1]
    %v550 = vperm.slane %v548, 0
    %v552 = vadd.f32 %v547, %v550
    %553 = vst.msk [vmem:[#allocation2] sm:$0xff] %vm473, %v552
    // Predicated region
    $region42: #{dreamrec_forward.1} parent=1 // pred_check
      _
    $region43: #{dreamrec_forward.1} parent=1 // pred_check_branch
      %555 = sbr.rel (0) target = $region45
    $region44: #{dreamrec_forward.1} parent=1 // pred_region
      %557 = vsyncadd [#allocation3], 0
      %s559 = sshll.u32 [#allocation2], 4
      %s560 = int_to_ptr.vmem [resolvable:$true] %s559
      %s561 = sshll.u32 %s10, 4
      %s562 = int_to_ptr.hbm [resolvable:$true] %s561
      %564 = dma.vmem_to_hbm [thread:$0]  %s560, 128, %s562, [#allocation3]
    $region45: #{dreamrec_forward.1} parent=1 // pred_fallthru
      _
    // Predicated region
    $region46: #{dreamrec_forward.1} parent=1 // pred_check
      _
    $region47: #{dreamrec_forward.1} parent=1 // pred_check_branch
      %566 = sbr.rel (0) target = $region49
    $region48: #{dreamrec_forward.1} parent=1 // pred_region
      %568 = dma.done [#allocation3], 128
    $region49: #{dreamrec_forward.1} parent=1 // pred_fallthru
      _
    %569 = vsyncpa [#allocation3], 1

</llo_original>
